<compile_context>
chip_gen: v7x
topology: tpu7x:2x2x1
jax: 0.10.0
libtpu: 0.0.40
codegen_flags: <defaults>
</compile_context>

<pallas_src>
import functools

import jax
import jax.numpy as jnp
import numpy as np
from jax.experimental import pallas as pl
from jax.experimental.pallas import tpu as pltpu

BN_EPS = 1e-5
K_DW = 5            # cv2 depthwise kernel size
R_DW = K_DW // 2    # its radius (autopad -> 2)


def _silu(v):
    # SiLU(x) = x * sigmoid(x); exp and the approximate reciprocal both land on
    # the EUP slot, keeping the multi-op f32 divide off the VALU path.
    return v * pl.reciprocal(1.0 + jnp.exp(-v), approx=True)


def _round_up(n, m):
    return ((n + m - 1) // m) * m


def ghostconv_kernel(x_ref, cmask_ref, w1_ref, s1_ref, b1_ref,
                     w2_ref, s2_ref, b2_ref, yo_ref, zo_ref, ypad_ref,
                     *, H, W, c_half, b_tile, poff):
    """One batch tile per grid step, lane-dense flat-spatial layout.

    x_ref:     (b_tile, c1, HW)      input block
    cmask_ref: (5, HW) f32 {0,1}     per-dx column masks (hoisted from the loop)
    w1_ref:    (c_half, c1)          cv1 1x1 weights
    s1/b1:     (c_half, 1)           cv1 folded BN scale / bias
    w2_ref:    (rows, 25)            cv2 5x5 dw weights, tap-major, batch-tiled
    s2/b2:     (rows, 1)             cv2 folded BN scale / bias, batch-tiled
    yo_ref:    (rows, HW)            cv1 branch output   (rows = b_tile*c_half)
    zo_ref:    (rows, HW)            cv2 branch output
    ypad_ref:  (rows, poff+HW+poff)  flat halo scratch for the depthwise taps
    """
    HW = H * W
    f32 = jnp.float32
    rows = b_tile * c_half

    # Zero only the two lane-aligned halo slabs (not the whole scratch).  Kept
    # unconditional (it is tiny) so the batch axis stays megacore-"parallel"
    # safe; the interior is fully overwritten below every step.
    ypad_ref[:, :poff] = jnp.zeros((rows, poff), f32)
    ypad_ref[:, poff + HW:] = jnp.zeros((rows, poff), f32)

    # ---- cv1: 1x1 conv = one MXU matmul per image + folded BN + SiLU --------
    w1f = w1_ref[...].astype(f32)
    s1 = s1_ref[...]
    b1 = b1_ref[...]
    for b in range(b_tile):                       # static unroll, b_tile small
        yb = jnp.dot(w1f, x_ref[b].astype(f32), preferred_element_type=f32)
        yb = _silu(yb * s1 + b1)
        ypad_ref[b * c_half:(b + 1) * c_half, poff:poff + HW] = yb
    y_all = ypad_ref[:, poff:poff + HW]           # (rows, HW), lane-aligned
    yo_ref[...] = y_all.astype(yo_ref.dtype)      # full, dense block store

    # ---- cv2: 5x5 depthwise conv (pad=2) -------------------------------------
    # 5 row-shifted plane loads (one per dy); the +-1/+-2 column shifts come
    # from XLU rolls.  Out-of-row taps read the zero halo; out-of-column taps
    # (including roll wrap-around lanes) are killed by the 5 precomputed column
    # masks, so no per-tap integer mask math and no row mask are needed.
    cm = cmask_ref[...]                           # (5, HW)
    w2v = w2_ref[...].astype(f32)                 # (rows, 25), read once
    s2 = s2_ref[...]
    b2 = b2_ref[...]
    bases = [ypad_ref[:, poff + dy * W: poff + dy * W + HW]
             for dy in range(-R_DW, R_DW + 1)]    # 5 x (rows, HW)

    acc = jnp.zeros((rows, HW), f32)
    for jdx, dx in enumerate(range(-R_DW, R_DW + 1)):
        part = jnp.zeros((rows, HW), f32)
        for idy in range(K_DW):
            tap = idy * K_DW + jdx                # (dy+2)*5 + (dx+2)
            base = bases[idy]
            shifted = base if dx == 0 else pltpu.roll(
                base, shift=(-dx) % HW, axis=1)
            part = part + w2v[:, tap:tap + 1] * shifted
        acc = acc + part * cm[jdx:jdx + 1, :]     # one column-mask mul per dx
    z = _silu(acc * s2 + b2)
    zo_ref[...] = z.astype(zo_ref.dtype)          # full, dense block store


def ghostconv_forward(x, w1, s1, b1, w2, s2, b2, *, batch_tile=None):
    """x: (N, c1, H, W); w1: (c_, c1, 1, 1); w2: (c_, 1, 5, 5);
    s*/b*: folded BN scale/bias per channel.  Returns (N, 2*c_, H, W)."""
    N, c1, H, W = x.shape
    c_half = w1.shape[0]
    HW = H * W
    if batch_tile is None:
        batch_tile = N                     # demo: whole batch in one grid step
    assert N % batch_tile == 0
    rows = batch_tile * c_half
    if batch_tile != N and rows % 8 != 0:
        raise ValueError("pick batch_tile so batch_tile*c_half is a multiple of"
                         " 8 (sublane-aligned output blocks) or batch_tile==N")
    # Lane-aligned halo >= 2*W so the 5 row-shifted plane loads stay in bounds.
    poff = _round_up(max(R_DW * W, 1), 128)

    # Layout plumbing only (no compute): lane-dense NC(HW) input and flattened
    # (N*c_, HW) outputs so every kernel store is a full dense slab.
    x_flat = x.reshape(N, c1, HW)
    w1_2d = w1.reshape(c_half, c1)
    s1c, b1c = s1.reshape(c_half, 1), b1.reshape(c_half, 1)
    w2_t = jnp.tile(w2.reshape(c_half, K_DW * K_DW), (batch_tile, 1))
    s2_t = jnp.tile(s2.reshape(c_half, 1), (batch_tile, 1))
    b2_t = jnp.tile(b2.reshape(c_half, 1), (batch_tile, 1))
    wcol = jnp.arange(HW, dtype=jnp.int32) % W
    cmask = jnp.stack(
        [((wcol + dx >= 0) & (wcol + dx < W)).astype(jnp.float32)
         for dx in range(-R_DW, R_DW + 1)], axis=0)          # (5, HW)

    kernel = functools.partial(ghostconv_kernel, H=H, W=W, c_half=c_half,
                               b_tile=batch_tile, poff=poff)
    whole = lambda g: (0, 0)   # tiny weights / affines / masks: full array

    y_flat, z_flat = pl.pallas_call(
        kernel,
        out_shape=(jax.ShapeDtypeStruct((N * c_half, HW), x.dtype),
                   jax.ShapeDtypeStruct((N * c_half, HW), x.dtype)),
        grid_spec=pltpu.PrefetchScalarGridSpec(
            num_scalar_prefetch=0,
            grid=(N // batch_tile,),
            in_specs=[
                pl.BlockSpec((batch_tile, c1, HW), lambda g: (g, 0, 0)),
                pl.BlockSpec((K_DW, HW), whole),
                pl.BlockSpec((c_half, c1), whole),
                pl.BlockSpec((c_half, 1), whole),
                pl.BlockSpec((c_half, 1), whole),
                pl.BlockSpec((rows, K_DW * K_DW), whole),
                pl.BlockSpec((rows, 1), whole),
                pl.BlockSpec((rows, 1), whole),
            ],
            out_specs=[
                pl.BlockSpec((rows, HW), lambda g: (g, 0)),
                pl.BlockSpec((rows, HW), lambda g: (g, 0)),
            ],
            scratch_shapes=[pltpu.VMEM((rows, poff + HW + poff), jnp.float32)],
        ),
        compiler_params=pltpu.CompilerParams(
            dimension_semantics=("parallel",)),
    )(x_flat, cmask, w1_2d, s1c, b1c, w2_t, s2_t, b2_t)

    y4 = y_flat.reshape(N, c_half, H, W)
    z4 = z_flat.reshape(N, c_half, H, W)
    return jnp.concatenate([y4, z4], axis=1)


def ref_ghostconv(x, w1, s1, b1, w2, s2, b2):
    """Pure-JAX reference: same math as PyTorch GhostConv (BN folded, SiLU)."""
    c_half = w1.shape[0]

    def conv_bn_silu(v, w, s, b, pad, groups):
        o = jax.lax.conv_general_dilated(
            v, w, window_strides=(1, 1), padding=[(pad, pad), (pad, pad)],
            dimension_numbers=("NCHW", "OIHW", "NCHW"),
            feature_group_count=groups)
        o = o * s[None, :, None, None] + b[None, :, None, None]
        return o * jax.nn.sigmoid(o)

    y = conv_bn_silu(x, w1, s1, b1, 0, 1)            # cv1: 1x1, pad=0
    z = conv_bn_silu(y, w2, s2, b2, R_DW, c_half)    # cv2: 5x5 depthwise, pad=2
    return jnp.concatenate([y, z], axis=1)


if __name__ == "__main__":
    # GhostConv(c1=4, c2=4, k=1, s=1)  ->  c_ = c2 // 2 = 2
    N, c1, c2 = 2, 4, 4
    H = W = 16
    c_half = c2 // 2

    key = jax.random.PRNGKey(0)
    ks = jax.random.split(key, 11)

    w1 = 0.2 * jax.random.normal(ks[0], (c_half, c1, 1, 1), jnp.float32)
    w2 = 0.2 * jax.random.normal(ks[1], (c_half, 1, K_DW, K_DW), jnp.float32)

    def bn_fold(kg, kb, km, kv, c):
        gamma = 1.0 + 0.1 * jax.random.normal(kg, (c,), jnp.float32)
        beta = 0.1 * jax.random.normal(kb, (c,), jnp.float32)
        mean = 0.1 * jax.random.normal(km, (c,), jnp.float32)
        var = jnp.abs(jax.random.normal(kv, (c,), jnp.float32)) + 0.5
        scale = gamma / jnp.sqrt(var + BN_EPS)
        bias = beta - mean * scale
        return scale, bias

    s1, b1 = bn_fold(ks[2], ks[3], ks[4], ks[5], c_half)
    s2, b2 = bn_fold(ks[6], ks[7], ks[8], ks[9], c_half)

    x = jax.random.normal(ks[10], (N, c1, H, W), jnp.float32)

    out = jax.block_until_ready(ghostconv_forward(x, w1, s1, b1, w2, s2, b2))
    expected = jax.block_until_ready(ref_ghostconv(x, w1, s1, b1, w2, s2, b2))

    # Kernel cv1 runs on the MXU and SiLU uses the approximate EUP reciprocal;
    # the reference goes through XLA's conv/divide path, so the tolerance sits
    # above that rounding noise but far below any structural error.
    np.testing.assert_allclose(np.asarray(out), np.asarray(expected),
                               rtol=2e-2, atol=2e-2)
    print("KERNEL_OK")
</pallas_src>

<mosaic_0001>
module attributes {stable_mosaic.version = 11 : i64} {
  func.func @ghostconv_kernel(%arg0: i32, %arg1: memref<2x4x256xf32, #tpu.memory_space<vmem>>, %arg2: memref<5x256xf32, #tpu.memory_space<vmem>>, %arg3: memref<2x4xf32, #tpu.memory_space<vmem>>, %arg4: memref<2x1xf32, #tpu.memory_space<vmem>>, %arg5: memref<2x1xf32, #tpu.memory_space<vmem>>, %arg6: memref<4x25xf32, #tpu.memory_space<vmem>>, %arg7: memref<4x1xf32, #tpu.memory_space<vmem>>, %arg8: memref<4x1xf32, #tpu.memory_space<vmem>>, %arg9: memref<4x256xf32, #tpu.memory_space<vmem>>, %arg10: memref<4x256xf32, #tpu.memory_space<vmem>>, %arg11: memref<4x512xf32, #tpu.memory_space<vmem>>) attributes {dimension_semantics = [#tpu.dimension_semantics<parallel>], iteration_bounds = array<i64: 1>, scalar_prefetch = 0 : i64, scratch_operands = 1 : i64, tpu.core_type = #tpu.core_type<tc>, window_params = [{transform_indices = @transform_0, window_bounds = array<i64: 2, 4, 256>}, {pipeline_mode = #tpu.pipeline_mode<synchronous>, transform_indices = @transform_1, window_bounds = array<i64: 5, 256>}, {pipeline_mode = #tpu.pipeline_mode<synchronous>, transform_indices = @transform_2, window_bounds = array<i64: 2, 4>}, {pipeline_mode = #tpu.pipeline_mode<synchronous>, transform_indices = @transform_3, window_bounds = array<i64: 2, 1>}, {pipeline_mode = #tpu.pipeline_mode<synchronous>, transform_indices = @transform_4, window_bounds = array<i64: 2, 1>}, {pipeline_mode = #tpu.pipeline_mode<synchronous>, transform_indices = @transform_5, window_bounds = array<i64: 4, 25>}, {pipeline_mode = #tpu.pipeline_mode<synchronous>, transform_indices = @transform_6, window_bounds = array<i64: 4, 1>}, {pipeline_mode = #tpu.pipeline_mode<synchronous>, transform_indices = @transform_7, window_bounds = array<i64: 4, 1>}, {transform_indices = @transform_8, window_bounds = array<i64: 4, 256>}, {transform_indices = @transform_9, window_bounds = array<i64: 4, 256>}]} {
    %cst = arith.constant 0.000000e+00 : f32
    %0 = vector.broadcast %cst : f32 to vector<4x128xf32>
    %c0 = arith.constant 0 : index
    %c0_0 = arith.constant 0 : index
    %1 = vector.load %arg11[%c0, %c0_0] : memref<4x512xf32, #tpu.memory_space<vmem>>, vector<4x128xf32>
    tpu.vector_store %arg11[%c0, %c0_0], %0 {strides = array<i32>} : memref<4x512xf32, #tpu.memory_space<vmem>>, vector<4x128xf32>,
    %cst_1 = arith.constant 0.000000e+00 : f32
    %2 = vector.broadcast %cst_1 : f32 to vector<4x128xf32>
    %c0_2 = arith.constant 0 : index
    %c384 = arith.constant 384 : index
    %3 = vector.load %arg11[%c0_2, %c384] : memref<4x512xf32, #tpu.memory_space<vmem>>, vector<4x128xf32>
    tpu.vector_store %arg11[%c0_2, %c384], %2 {strides = array<i32>} : memref<4x512xf32, #tpu.memory_space<vmem>>, vector<4x128xf32>,
    %c0_3 = arith.constant 0 : index
    %c0_4 = arith.constant 0 : index
    %4 = vector.load %arg3[%c0_3, %c0_4] : memref<2x4xf32, #tpu.memory_space<vmem>>, vector<2x4xf32>
    %c0_5 = arith.constant 0 : index
    %c0_6 = arith.constant 0 : index
    %5 = vector.load %arg4[%c0_5, %c0_6] : memref<2x1xf32, #tpu.memory_space<vmem>>, vector<2x1xf32>
    %c0_7 = arith.constant 0 : index
    %c0_8 = arith.constant 0 : index
    %6 = vector.load %arg5[%c0_7, %c0_8] : memref<2x1xf32, #tpu.memory_space<vmem>>, vector<2x1xf32>
    %c0_9 = arith.constant 0 : index
    %c0_10 = arith.constant 0 : index
    %c0_11 = arith.constant 0 : index
    %7 = vector.load %arg1[%c0_9, %c0_10, %c0_11] : memref<2x4x256xf32, #tpu.memory_space<vmem>>, vector<1x4x256xf32>
    %8 = vector.shape_cast %7 : vector<1x4x256xf32> to vector<4x256xf32>
    %cst_12 = arith.constant dense<0.000000e+00> : vector<2x256xf32>
    %9 = tpu.matmul %4, %8, %cst_12 {dimension_numbers = #tpu.dot_dimension_numbers<[1], [0], [0], [1], [0, 0, 1, 1], [], []>} : vector<2x4xf32>, vector<4x256xf32>, vector<2x256xf32> -> vector<2x256xf32>
    %10 = vector.broadcast %5 : vector<2x1xf32> to vector<2x256xf32>
    %11 = arith.mulf %9, %10 : vector<2x256xf32>
    %12 = vector.broadcast %6 : vector<2x1xf32> to vector<2x256xf32>
    %13 = arith.addf %11, %12 : vector<2x256xf32>
    %cst_13 = arith.constant 0.000000e+00 : f32
    %14 = vector.broadcast %cst_13 : f32 to vector<2x256xf32>
    %15 = arith.subf %14, %13 : vector<2x256xf32>
    %16 = math.exp %15 : vector<2x256xf32>
    %cst_14 = arith.constant 1.000000e+00 : f32
    %17 = vector.broadcast %cst_14 : f32 to vector<2x256xf32>
    %18 = arith.addf %17, %16 : vector<2x256xf32>
    %19 = tpu.reciprocal %18 {approx = true} : vector<2x256xf32> -> vector<2x256xf32>
    %20 = arith.mulf %13, %19 : vector<2x256xf32>
    %c0_15 = arith.constant 0 : index
    %c128 = arith.constant 128 : index
    %21 = vector.load %arg11[%c0_15, %c128] : memref<4x512xf32, #tpu.memory_space<vmem>>, vector<2x256xf32>
    tpu.vector_store %arg11[%c0_15, %c128], %20 {strides = array<i32>} : memref<4x512xf32, #tpu.memory_space<vmem>>, vector<2x256xf32>,
    %c1 = arith.constant 1 : index
    %c0_16 = arith.constant 0 : index
    %c0_17 = arith.constant 0 : index
    %22 = vector.load %arg1[%c1, %c0_16, %c0_17] : memref<2x4x256xf32, #tpu.memory_space<vmem>>, vector<1x4x256xf32>
    %23 = vector.shape_cast %22 : vector<1x4x256xf32> to vector<4x256xf32>
    %cst_18 = arith.constant dense<0.000000e+00> : vector<2x256xf32>
    %24 = tpu.matmul %4, %23, %cst_18 {dimension_numbers = #tpu.dot_dimension_numbers<[1], [0], [0], [1], [0, 0, 1, 1], [], []>} : vector<2x4xf32>, vector<4x256xf32>, vector<2x256xf32> -> vector<2x256xf32>
    %25 = vector.broadcast %5 : vector<2x1xf32> to vector<2x256xf32>
    %26 = arith.mulf %24, %25 : vector<2x256xf32>
    %27 = vector.broadcast %6 : vector<2x1xf32> to vector<2x256xf32>
    %28 = arith.addf %26, %27 : vector<2x256xf32>
    %cst_19 = arith.constant 0.000000e+00 : f32
    %29 = vector.broadcast %cst_19 : f32 to vector<2x256xf32>
    %30 = arith.subf %29, %28 : vector<2x256xf32>
    %31 = math.exp %30 : vector<2x256xf32>
    %cst_20 = arith.constant 1.000000e+00 : f32
    %32 = vector.broadcast %cst_20 : f32 to vector<2x256xf32>
    %33 = arith.addf %32, %31 : vector<2x256xf32>
    %34 = tpu.reciprocal %33 {approx = true} : vector<2x256xf32> -> vector<2x256xf32>
    %35 = arith.mulf %28, %34 : vector<2x256xf32>
    %c2 = arith.constant 2 : index
    %c128_21 = arith.constant 128 : index
    %36 = vector.load %arg11[%c2, %c128_21] : memref<4x512xf32, #tpu.memory_space<vmem>>, vector<2x256xf32>
    tpu.vector_store %arg11[%c2, %c128_21], %35 {strides = array<i32>} : memref<4x512xf32, #tpu.memory_space<vmem>>, vector<2x256xf32>,
    %c0_22 = arith.constant 0 : index
    %c128_23 = arith.constant 128 : index
    %37 = vector.load %arg11[%c0_22, %c128_23] : memref<4x512xf32, #tpu.memory_space<vmem>>, vector<4x256xf32>
    %c0_24 = arith.constant 0 : index
    %c0_25 = arith.constant 0 : index
    %38 = vector.load %arg9[%c0_24, %c0_25] : memref<4x256xf32, #tpu.memory_space<vmem>>, vector<4x256xf32>
    tpu.vector_store %arg9[%c0_24, %c0_25], %37 {strides = array<i32>} : memref<4x256xf32, #tpu.memory_space<vmem>>, vector<4x256xf32>,
    %c0_26 = arith.constant 0 : index
    %c0_27 = arith.constant 0 : index
    %39 = vector.load %arg2[%c0_26, %c0_27] : memref<5x256xf32, #tpu.memory_space<vmem>>, vector<5x256xf32>
    %c0_28 = arith.constant 0 : index
    %c0_29 = arith.constant 0 : index
    %40 = vector.load %arg6[%c0_28, %c0_29] : memref<4x25xf32, #tpu.memory_space<vmem>>, vector<4x25xf32>
    %c0_30 = arith.constant 0 : index
    %c0_31 = arith.constant 0 : index
    %41 = vector.load %arg7[%c0_30, %c0_31] : memref<4x1xf32, #tpu.memory_space<vmem>>, vector<4x1xf32>
    %c0_32 = arith.constant 0 : index
    %c0_33 = arith.constant 0 : index
    %42 = vector.load %arg8[%c0_32, %c0_33] : memref<4x1xf32, #tpu.memory_space<vmem>>, vector<4x1xf32>
    %c0_34 = arith.constant 0 : index
    %c96 = arith.constant 96 : index
    %43 = vector.load %arg11[%c0_34, %c96] : memref<4x512xf32, #tpu.memory_space<vmem>>, vector<4x256xf32>
    %c0_35 = arith.constant 0 : index
    %c112 = arith.constant 112 : index
    %44 = vector.load %arg11[%c0_35, %c112] : memref<4x512xf32, #tpu.memory_space<vmem>>, vector<4x256xf32>
    %c0_36 = arith.constant 0 : index
    %c128_37 = arith.constant 128 : index
    %45 = vector.load %arg11[%c0_36, %c128_37] : memref<4x512xf32, #tpu.memory_space<vmem>>, vector<4x256xf32>
    %c0_38 = arith.constant 0 : index
    %c144 = arith.constant 144 : index
    %46 = vector.load %arg11[%c0_38, %c144] : memref<4x512xf32, #tpu.memory_space<vmem>>, vector<4x256xf32>
    %c0_39 = arith.constant 0 : index
    %c160 = arith.constant 160 : index
    %47 = vector.load %arg11[%c0_39, %c160] : memref<4x512xf32, #tpu.memory_space<vmem>>, vector<4x256xf32>
    %cst_40 = arith.constant 0.000000e+00 : f32
    %48 = vector.broadcast %cst_40 : f32 to vector<4x256xf32>
    %cst_41 = arith.constant 0.000000e+00 : f32
    %49 = vector.broadcast %cst_41 : f32 to vector<4x256xf32>
    %c2_i32 = arith.constant 2 : i32
    %50 = tpu.dynamic_rotate %43 by %c2_i32 dim 1 : vector<4x256xf32>, i32 -> vector<4x256xf32>
    %51 = vector.extract_strided_slice %40 {offsets = [0, 0], sizes = [4, 1], strides = [1, 1]} : vector<4x25xf32> to vector<4x1xf32>
    %52 = vector.broadcast %51 : vector<4x1xf32> to vector<4x256xf32>
    %53 = arith.mulf %52, %50 : vector<4x256xf32>
    %54 = arith.addf %49, %53 : vector<4x256xf32>
    %c2_i32_42 = arith.constant 2 : i32
    %55 = tpu.dynamic_rotate %44 by %c2_i32_42 dim 1 : vector<4x256xf32>, i32 -> vector<4x256xf32>
    %56 = vector.extract_strided_slice %40 {offsets = [0, 5], sizes = [4, 1], strides = [1, 1]} : vector<4x25xf32> to vector<4x1xf32>
    %57 = vector.broadcast %56 : vector<4x1xf32> to vector<4x256xf32>
    %58 = arith.mulf %57, %55 : vector<4x256xf32>
    %59 = arith.addf %54, %58 : vector<4x256xf32>
    %c2_i32_43 = arith.constant 2 : i32
    %60 = tpu.dynamic_rotate %45 by %c2_i32_43 dim 1 : vector<4x256xf32>, i32 -> vector<4x256xf32>
    %61 = vector.extract_strided_slice %40 {offsets = [0, 10], sizes = [4, 1], strides = [1, 1]} : vector<4x25xf32> to vector<4x1xf32>
    %62 = vector.broadcast %61 : vector<4x1xf32> to vector<4x256xf32>
    %63 = arith.mulf %62, %60 : vector<4x256xf32>
    %64 = arith.addf %59, %63 : vector<4x256xf32>
    %c2_i32_44 = arith.constant 2 : i32
    %65 = tpu.dynamic_rotate %46 by %c2_i32_44 dim 1 : vector<4x256xf32>, i32 -> vector<4x256xf32>
    %66 = vector.extract_strided_slice %40 {offsets = [0, 15], sizes = [4, 1], strides = [1, 1]} : vector<4x25xf32> to vector<4x1xf32>
    %67 = vector.broadcast %66 : vector<4x1xf32> to vector<4x256xf32>
    %68 = arith.mulf %67, %65 : vector<4x256xf32>
    %69 = arith.addf %64, %68 : vector<4x256xf32>
    %c2_i32_45 = arith.constant 2 : i32
    %70 = tpu.dynamic_rotate %47 by %c2_i32_45 dim 1 : vector<4x256xf32>, i32 -> vector<4x256xf32>
    %71 = vector.extract_strided_slice %40 {offsets = [0, 20], sizes = [4, 1], strides = [1, 1]} : vector<4x25xf32> to vector<4x1xf32>
    %72 = vector.broadcast %71 : vector<4x1xf32> to vector<4x256xf32>
    %73 = arith.mulf %72, %70 : vector<4x256xf32>
    %74 = arith.addf %69, %73 : vector<4x256xf32>
    %75 = vector.extract_strided_slice %39 {offsets = [0, 0], sizes = [1, 256], strides = [1, 1]} : vector<5x256xf32> to vector<1x256xf32>
    %76 = vector.broadcast %75 : vector<1x256xf32> to vector<4x256xf32>
    %77 = arith.mulf %74, %76 : vector<4x256xf32>
    %78 = arith.addf %48, %77 : vector<4x256xf32>
    %cst_46 = arith.constant 0.000000e+00 : f32
    %79 = vector.broadcast %cst_46 : f32 to vector<4x256xf32>
    %c1_i32 = arith.constant 1 : i32
    %80 = tpu.dynamic_rotate %43 by %c1_i32 dim 1 : vector<4x256xf32>, i32 -> vector<4x256xf32>
    %81 = vector.extract_strided_slice %40 {offsets = [0, 1], sizes = [4, 1], strides = [1, 1]} : vector<4x25xf32> to vector<4x1xf32>
    %82 = vector.broadcast %81 : vector<4x1xf32> to vector<4x256xf32>
    %83 = arith.mulf %82, %80 : vector<4x256xf32>
    %84 = arith.addf %79, %83 : vector<4x256xf32>
    %c1_i32_47 = arith.constant 1 : i32
    %85 = tpu.dynamic_rotate %44 by %c1_i32_47 dim 1 : vector<4x256xf32>, i32 -> vector<4x256xf32>
    %86 = vector.extract_strided_slice %40 {offsets = [0, 6], sizes = [4, 1], strides = [1, 1]} : vector<4x25xf32> to vector<4x1xf32>
    %87 = vector.broadcast %86 : vector<4x1xf32> to vector<4x256xf32>
    %88 = arith.mulf %87, %85 : vector<4x256xf32>
    %89 = arith.addf %84, %88 : vector<4x256xf32>
    %c1_i32_48 = arith.constant 1 : i32
    %90 = tpu.dynamic_rotate %45 by %c1_i32_48 dim 1 : vector<4x256xf32>, i32 -> vector<4x256xf32>
    %91 = vector.extract_strided_slice %40 {offsets = [0, 11], sizes = [4, 1], strides = [1, 1]} : vector<4x25xf32> to vector<4x1xf32>
    %92 = vector.broadcast %91 : vector<4x1xf32> to vector<4x256xf32>
    %93 = arith.mulf %92, %90 : vector<4x256xf32>
    %94 = arith.addf %89, %93 : vector<4x256xf32>
    %c1_i32_49 = arith.constant 1 : i32
    %95 = tpu.dynamic_rotate %46 by %c1_i32_49 dim 1 : vector<4x256xf32>, i32 -> vector<4x256xf32>
    %96 = vector.extract_strided_slice %40 {offsets = [0, 16], sizes = [4, 1], strides = [1, 1]} : vector<4x25xf32> to vector<4x1xf32>
    %97 = vector.broadcast %96 : vector<4x1xf32> to vector<4x256xf32>
    %98 = arith.mulf %97, %95 : vector<4x256xf32>
    %99 = arith.addf %94, %98 : vector<4x256xf32>
    %c1_i32_50 = arith.constant 1 : i32
    %100 = tpu.dynamic_rotate %47 by %c1_i32_50 dim 1 : vector<4x256xf32>, i32 -> vector<4x256xf32>
    %101 = vector.extract_strided_slice %40 {offsets = [0, 21], sizes = [4, 1], strides = [1, 1]} : vector<4x25xf32> to vector<4x1xf32>
    %102 = vector.broadcast %101 : vector<4x1xf32> to vector<4x256xf32>
    %103 = arith.mulf %102, %100 : vector<4x256xf32>
    %104 = arith.addf %99, %103 : vector<4x256xf32>
    %105 = vector.extract_strided_slice %39 {offsets = [1, 0], sizes = [1, 256], strides = [1, 1]} : vector<5x256xf32> to vector<1x256xf32>
    %106 = vector.broadcast %105 : vector<1x256xf32> to vector<4x256xf32>
    %107 = arith.mulf %104, %106 : vector<4x256xf32>
    %108 = arith.addf %78, %107 : vector<4x256xf32>
    %cst_51 = arith.constant 0.000000e+00 : f32
    %109 = vector.broadcast %cst_51 : f32 to vector<4x256xf32>
    %110 = vector.extract_strided_slice %40 {offsets = [0, 2], sizes = [4, 1], strides = [1, 1]} : vector<4x25xf32> to vector<4x1xf32>
    %111 = vector.broadcast %110 : vector<4x1xf32> to vector<4x256xf32>
    %112 = arith.mulf %111, %43 : vector<4x256xf32>
    %113 = arith.addf %109, %112 : vector<4x256xf32>
    %114 = vector.extract_strided_slice %40 {offsets = [0, 7], sizes = [4, 1], strides = [1, 1]} : vector<4x25xf32> to vector<4x1xf32>
    %115 = vector.broadcast %114 : vector<4x1xf32> to vector<4x256xf32>
    %116 = arith.mulf %115, %44 : vector<4x256xf32>
    %117 = arith.addf %113, %116 : vector<4x256xf32>
    %118 = vector.extract_strided_slice %40 {offsets = [0, 12], sizes = [4, 1], strides = [1, 1]} : vector<4x25xf32> to vector<4x1xf32>
    %119 = vector.broadcast %118 : vector<4x1xf32> to vector<4x256xf32>
    %120 = arith.mulf %119, %45 : vector<4x256xf32>
    %121 = arith.addf %117, %120 : vector<4x256xf32>
    %122 = vector.extract_strided_slice %40 {offsets = [0, 17], sizes = [4, 1], strides = [1, 1]} : vector<4x25xf32> to vector<4x1xf32>
    %123 = vector.broadcast %122 : vector<4x1xf32> to vector<4x256xf32>
    %124 = arith.mulf %123, %46 : vector<4x256xf32>
    %125 = arith.addf %121, %124 : vector<4x256xf32>
    %126 = vector.extract_strided_slice %40 {offsets = [0, 22], sizes = [4, 1], strides = [1, 1]} : vector<4x25xf32> to vector<4x1xf32>
    %127 = vector.broadcast %126 : vector<4x1xf32> to vector<4x256xf32>
    %128 = arith.mulf %127, %47 : vector<4x256xf32>
    %129 = arith.addf %125, %128 : vector<4x256xf32>
    %130 = vector.extract_strided_slice %39 {offsets = [2, 0], sizes = [1, 256], strides = [1, 1]} : vector<5x256xf32> to vector<1x256xf32>
    %131 = vector.broadcast %130 : vector<1x256xf32> to vector<4x256xf32>
    %132 = arith.mulf %129, %131 : vector<4x256xf32>
    %133 = arith.addf %108, %132 : vector<4x256xf32>
    %cst_52 = arith.constant 0.000000e+00 : f32
    %134 = vector.broadcast %cst_52 : f32 to vector<4x256xf32>
    %c255_i32 = arith.constant 255 : i32
    %135 = tpu.dynamic_rotate %43 by %c255_i32 dim 1 : vector<4x256xf32>, i32 -> vector<4x256xf32>
    %136 = vector.extract_strided_slice %40 {offsets = [0, 3], sizes = [4, 1], strides = [1, 1]} : vector<4x25xf32> to vector<4x1xf32>
    %137 = vector.broadcast %136 : vector<4x1xf32> to vector<4x256xf32>
    %138 = arith.mulf %137, %135 : vector<4x256xf32>
    %139 = arith.addf %134, %138 : vector<4x256xf32>
    %c255_i32_53 = arith.constant 255 : i32
    %140 = tpu.dynamic_rotate %44 by %c255_i32_53 dim 1 : vector<4x256xf32>, i32 -> vector<4x256xf32>
    %141 = vector.extract_strided_slice %40 {offsets = [0, 8], sizes = [4, 1], strides = [1, 1]} : vector<4x25xf32> to vector<4x1xf32>
    %142 = vector.broadcast %141 : vector<4x1xf32> to vector<4x256xf32>
    %143 = arith.mulf %142, %140 : vector<4x256xf32>
    %144 = arith.addf %139, %143 : vector<4x256xf32>
    %c255_i32_54 = arith.constant 255 : i32
    %145 = tpu.dynamic_rotate %45 by %c255_i32_54 dim 1 : vector<4x256xf32>, i32 -> vector<4x256xf32>
    %146 = vector.extract_strided_slice %40 {offsets = [0, 13], sizes = [4, 1], strides = [1, 1]} : vector<4x25xf32> to vector<4x1xf32>
    %147 = vector.broadcast %146 : vector<4x1xf32> to vector<4x256xf32>
    %148 = arith.mulf %147, %145 : vector<4x256xf32>
    %149 = arith.addf %144, %148 : vector<4x256xf32>
    %c255_i32_55 = arith.constant 255 : i32
    %150 = tpu.dynamic_rotate %46 by %c255_i32_55 dim 1 : vector<4x256xf32>, i32 -> vector<4x256xf32>
    %151 = vector.extract_strided_slice %40 {offsets = [0, 18], sizes = [4, 1], strides = [1, 1]} : vector<4x25xf32> to vector<4x1xf32>
    %152 = vector.broadcast %151 : vector<4x1xf32> to vector<4x256xf32>
    %153 = arith.mulf %152, %150 : vector<4x256xf32>
    %154 = arith.addf %149, %153 : vector<4x256xf32>
    %c255_i32_56 = arith.constant 255 : i32
    %155 = tpu.dynamic_rotate %47 by %c255_i32_56 dim 1 : vector<4x256xf32>, i32 -> vector<4x256xf32>
    %156 = vector.extract_strided_slice %40 {offsets = [0, 23], sizes = [4, 1], strides = [1, 1]} : vector<4x25xf32> to vector<4x1xf32>
    %157 = vector.broadcast %156 : vector<4x1xf32> to vector<4x256xf32>
    %158 = arith.mulf %157, %155 : vector<4x256xf32>
    %159 = arith.addf %154, %158 : vector<4x256xf32>
    %160 = vector.extract_strided_slice %39 {offsets = [3, 0], sizes = [1, 256], strides = [1, 1]} : vector<5x256xf32> to vector<1x256xf32>
    %161 = vector.broadcast %160 : vector<1x256xf32> to vector<4x256xf32>
    %162 = arith.mulf %159, %161 : vector<4x256xf32>
    %163 = arith.addf %133, %162 : vector<4x256xf32>
    %cst_57 = arith.constant 0.000000e+00 : f32
    %164 = vector.broadcast %cst_57 : f32 to vector<4x256xf32>
    %c254_i32 = arith.constant 254 : i32
    %165 = tpu.dynamic_rotate %43 by %c254_i32 dim 1 : vector<4x256xf32>, i32 -> vector<4x256xf32>
    %166 = vector.extract_strided_slice %40 {offsets = [0, 4], sizes = [4, 1], strides = [1, 1]} : vector<4x25xf32> to vector<4x1xf32>
    %167 = vector.broadcast %166 : vector<4x1xf32> to vector<4x256xf32>
    %168 = arith.mulf %167, %165 : vector<4x256xf32>
    %169 = arith.addf %164, %168 : vector<4x256xf32>
    %c254_i32_58 = arith.constant 254 : i32
    %170 = tpu.dynamic_rotate %44 by %c254_i32_58 dim 1 : vector<4x256xf32>, i32 -> vector<4x256xf32>
    %171 = vector.extract_strided_slice %40 {offsets = [0, 9], sizes = [4, 1], strides = [1, 1]} : vector<4x25xf32> to vector<4x1xf32>
    %172 = vector.broadcast %171 : vector<4x1xf32> to vector<4x256xf32>
    %173 = arith.mulf %172, %170 : vector<4x256xf32>
    %174 = arith.addf %169, %173 : vector<4x256xf32>
    %c254_i32_59 = arith.constant 254 : i32
    %175 = tpu.dynamic_rotate %45 by %c254_i32_59 dim 1 : vector<4x256xf32>, i32 -> vector<4x256xf32>
    %176 = vector.extract_strided_slice %40 {offsets = [0, 14], sizes = [4, 1], strides = [1, 1]} : vector<4x25xf32> to vector<4x1xf32>
    %177 = vector.broadcast %176 : vector<4x1xf32> to vector<4x256xf32>
    %178 = arith.mulf %177, %175 : vector<4x256xf32>
    %179 = arith.addf %174, %178 : vector<4x256xf32>
    %c254_i32_60 = arith.constant 254 : i32
    %180 = tpu.dynamic_rotate %46 by %c254_i32_60 dim 1 : vector<4x256xf32>, i32 -> vector<4x256xf32>
    %181 = vector.extract_strided_slice %40 {offsets = [0, 19], sizes = [4, 1], strides = [1, 1]} : vector<4x25xf32> to vector<4x1xf32>
    %182 = vector.broadcast %181 : vector<4x1xf32> to vector<4x256xf32>
    %183 = arith.mulf %182, %180 : vector<4x256xf32>
    %184 = arith.addf %179, %183 : vector<4x256xf32>
    %c254_i32_61 = arith.constant 254 : i32
    %185 = tpu.dynamic_rotate %47 by %c254_i32_61 dim 1 : vector<4x256xf32>, i32 -> vector<4x256xf32>
    %186 = vector.extract_strided_slice %40 {offsets = [0, 24], sizes = [4, 1], strides = [1, 1]} : vector<4x25xf32> to vector<4x1xf32>
    %187 = vector.broadcast %186 : vector<4x1xf32> to vector<4x256xf32>
    %188 = arith.mulf %187, %185 : vector<4x256xf32>
    %189 = arith.addf %184, %188 : vector<4x256xf32>
    %190 = vector.extract_strided_slice %39 {offsets = [4, 0], sizes = [1, 256], strides = [1, 1]} : vector<5x256xf32> to vector<1x256xf32>
    %191 = vector.broadcast %190 : vector<1x256xf32> to vector<4x256xf32>
    %192 = arith.mulf %189, %191 : vector<4x256xf32>
    %193 = arith.addf %163, %192 : vector<4x256xf32>
    %194 = vector.broadcast %41 : vector<4x1xf32> to vector<4x256xf32>
    %195 = arith.mulf %193, %194 : vector<4x256xf32>
    %196 = vector.broadcast %42 : vector<4x1xf32> to vector<4x256xf32>
    %197 = arith.addf %195, %196 : vector<4x256xf32>
    %cst_62 = arith.constant 0.000000e+00 : f32
    %198 = vector.broadcast %cst_62 : f32 to vector<4x256xf32>
    %199 = arith.subf %198, %197 : vector<4x256xf32>
    %200 = math.exp %199 : vector<4x256xf32>
    %cst_63 = arith.constant 1.000000e+00 : f32
    %201 = vector.broadcast %cst_63 : f32 to vector<4x256xf32>
    %202 = arith.addf %201, %200 : vector<4x256xf32>
    %203 = tpu.reciprocal %202 {approx = true} : vector<4x256xf32> -> vector<4x256xf32>
    %204 = arith.mulf %197, %203 : vector<4x256xf32>
    %c0_64 = arith.constant 0 : index
    %c0_65 = arith.constant 0 : index
    %205 = vector.load %arg10[%c0_64, %c0_65] : memref<4x256xf32, #tpu.memory_space<vmem>>, vector<4x256xf32>
    tpu.vector_store %arg10[%c0_64, %c0_65], %204 {strides = array<i32>} : memref<4x256xf32, #tpu.memory_space<vmem>>, vector<4x256xf32>,
    return
  }
  func.func @transform_0(%arg0: i32) -> (i32, i32, i32) {
    %c0_i32 = arith.constant 0 : i32
    %c0_i32_0 = arith.constant 0 : i32
    %c0_i32_1 = arith.constant 0 : i32
    return %arg0, %c0_i32, %c0_i32_0 : i32, i32, i32
  }
  func.func @transform_1(%arg0: i32) -> (i32, i32) {
    %c0_i32 = arith.constant 0 : i32
    %c0_i32_0 = arith.constant 0 : i32
    %c0_i32_1 = arith.constant 0 : i32
    return %c0_i32, %c0_i32_0 : i32, i32
  }
  func.func @transform_2(%arg0: i32) -> (i32, i32) {
    %c0_i32 = arith.constant 0 : i32
    %c0_i32_0 = arith.constant 0 : i32
    %c0_i32_1 = arith.constant 0 : i32
    return %c0_i32, %c0_i32_0 : i32, i32
  }
  func.func @transform_3(%arg0: i32) -> (i32, i32) {
    %c0_i32 = arith.constant 0 : i32
    %c0_i32_0 = arith.constant 0 : i32
    %c0_i32_1 = arith.constant 0 : i32
    return %c0_i32, %c0_i32_0 : i32, i32
  }
  func.func @transform_4(%arg0: i32) -> (i32, i32) {
    %c0_i32 = arith.constant 0 : i32
    %c0_i32_0 = arith.constant 0 : i32
    %c0_i32_1 = arith.constant 0 : i32
    return %c0_i32, %c0_i32_0 : i32, i32
  }
  func.func @transform_5(%arg0: i32) -> (i32, i32) {
    %c0_i32 = arith.constant 0 : i32
    %c0_i32_0 = arith.constant 0 : i32
    %c0_i32_1 = arith.constant 0 : i32
    return %c0_i32, %c0_i32_0 : i32, i32
  }
  func.func @transform_6(%arg0: i32) -> (i32, i32) {
    %c0_i32 = arith.constant 0 : i32
    %c0_i32_0 = arith.constant 0 : i32
    %c0_i32_1 = arith.constant 0 : i32
    return %c0_i32, %c0_i32_0 : i32, i32
  }
  func.func @transform_7(%arg0: i32) -> (i32, i32) {
    %c0_i32 = arith.constant 0 : i32
    %c0_i32_0 = arith.constant 0 : i32
    %c0_i32_1 = arith.constant 0 : i32
    return %c0_i32, %c0_i32_0 : i32, i32
  }
  func.func @transform_8(%arg0: i32) -> (i32, i32) {
    %c0_i32 = arith.constant 0 : i32
    %c0_i32_0 = arith.constant 0 : i32
    return %arg0, %c0_i32 : i32, i32
  }
  func.func @transform_9(%arg0: i32) -> (i32, i32) {
    %c0_i32 = arith.constant 0 : i32
    %c0_i32_0 = arith.constant 0 : i32
    return %arg0, %c0_i32 : i32, i32
  }
}

</mosaic_0001>

<llo_original>
// kernel: tpu_custom_call.1
$region0: #{tpu_custom_call.1}
  #allocation0 [shape = 'u32[]', space=smem, size = 0x4, offset = 0x4, fixed_abs, tag = 'smem constant byte address 0x4 - core index']
  #allocation1 [shape = 'u32[144,128]{1,0:T(1,128)}', space=vmem, size = 0x12000, scoped, tag = 'internal scratch']
  #allocation2 [shape = 'f32[4,512]{1,0:T(4,128)}', space=vmem, size = 0x2000, scoped, tag = 'scratch operand']
  %s0 = inlined_call_operand.vmem [shape: f32[2,4,256], index: 0, kind: input, shape index: {}]
  %s1 = inlined_call_operand.hbm [shape: f32[5,256], index: 1, kind: input, shape index: {}]
  %s2 = inlined_call_operand.vmem [shape: f32[2,4], index: 2, kind: input, shape index: {}]
  %s3 = inlined_call_operand.vmem [shape: f32[2,1], index: 3, kind: input, shape index: {}]
  %s4 = inlined_call_operand.vmem [shape: f32[2,1], index: 4, kind: input, shape index: {}]
  %s5 = inlined_call_operand.vmem [shape: f32[4,25], index: 5, kind: input, shape index: {}]
  %s6 = inlined_call_operand.vmem [shape: f32[4,1], index: 6, kind: input, shape index: {}]
  %s7 = inlined_call_operand.vmem [shape: f32[4,1], index: 7, kind: input, shape index: {}]
  %s8 = inlined_call_operand.hbm [shape: f32[4,256], index: 8, kind: output, shape index: {0}]
  %s9 = inlined_call_operand.hbm [shape: f32[4,256], index: 9, kind: output, shape index: {1}]
  %10 = xla_tuple %s8, %s9
  %s11 = sld [smem:[#allocation0]]
  $region54: #{tpu_custom_call.1} parent=0
    _
  %s13 = ssub.s32 1, %s11
  %s14 = scalar_select 0, %s13, %s11
  $region1: #{tpu_custom_call.1} parent=0
    #allocation3 [shape = 'u8[8192]{0}', space=vmem, size = 0x2000, scoped, tag = 'input window, operand 1, single buffered']
    #allocation4 [shape = 's32[1]{0}', space=sflag, size = 0x4, scoped, tag = 'scoped memory for tpu_custom_call.1']
    #allocation5 [shape = 's32[1]{0}', space=sflag, size = 0x4, scoped, tag = 'scoped memory for tpu_custom_call.1']
    #allocation6 [shape = 'u8[4096]{0}', space=vmem, size = 0x1000, scoped, tag = 'output window, operand 0, single buffered']
    #allocation7 [shape = 'u8[4096]{0}', space=vmem, size = 0x1000, scoped, tag = 'output window, operand 1, single buffered']
    #allocation8 [shape = 's32[1]{0}', space=sflag, size = 0x4, scoped, tag = 'scoped memory for tpu_custom_call.1']
    %15 = vsyncpa [#allocation4], 0
    %16 = vsyncpa [#allocation5], 0
    %17 = vsyncpa [#allocation8], 0
    // Predicated region
    $region2: #{tpu_custom_call.1} parent=1 // pred_check
      _
    $region3: #{tpu_custom_call.1} parent=1 // pred_check_branch
      %19 = sbr.rel (0) target = $region5
    $region4: #{tpu_custom_call.1} parent=1 // pred_region
      _
    $region5: #{tpu_custom_call.1} parent=1 // pred_fallthru
      _
    // Predicated region
    $region6: #{tpu_custom_call.1} parent=1 // pred_check
      _
    $region7: #{tpu_custom_call.1} parent=1 // pred_check_branch
      %21 = sbr.rel (0) target = $region9
    $region8: #{tpu_custom_call.1} parent=1 // pred_region
      %s23 = ssub.s32 256, 256
      %24 = vsyncadd [#allocation4], %s23
      %s26 = sshll.u32 [#allocation3], 4
      %s27 = int_to_ptr.vmem [resolvable:$true] %s26
      %29 = dma.hbm_to_vmem [thread:$0]  %s1, 256, %s27, [#allocation4]
    $region9: #{tpu_custom_call.1} parent=1 // pred_fallthru
      _
    // Predicated region
    $region10: #{tpu_custom_call.1} parent=1 // pred_check
      _
    $region11: #{tpu_custom_call.1} parent=1 // pred_check_branch
      %31 = sbr.rel (0) target = $region13
    $region12: #{tpu_custom_call.1} parent=1 // pred_region
      _
    $region13: #{tpu_custom_call.1} parent=1 // pred_fallthru
      _
    // Predicated region
    $region14: #{tpu_custom_call.1} parent=1 // pred_check
      _
    $region15: #{tpu_custom_call.1} parent=1 // pred_check_branch
      %33 = sbr.rel (0) target = $region17
    $region16: #{tpu_custom_call.1} parent=1 // pred_region
      _
    $region17: #{tpu_custom_call.1} parent=1 // pred_fallthru
      _
    // Predicated region
    $region18: #{tpu_custom_call.1} parent=1 // pred_check
      _
    $region19: #{tpu_custom_call.1} parent=1 // pred_check_branch
      %35 = sbr.rel (0) target = $region21
    $region20: #{tpu_custom_call.1} parent=1 // pred_region
      _
    $region21: #{tpu_custom_call.1} parent=1 // pred_fallthru
      _
    // Predicated region
    $region22: #{tpu_custom_call.1} parent=1 // pred_check
      _
    $region23: #{tpu_custom_call.1} parent=1 // pred_check_branch
      %37 = sbr.rel (0) target = $region25
    $region24: #{tpu_custom_call.1} parent=1 // pred_region
      _
    $region25: #{tpu_custom_call.1} parent=1 // pred_fallthru
      _
    // Predicated region
    $region26: #{tpu_custom_call.1} parent=1 // pred_check
      _
    $region27: #{tpu_custom_call.1} parent=1 // pred_check_branch
      %39 = sbr.rel (0) target = $region29
    $region28: #{tpu_custom_call.1} parent=1 // pred_region
      _
    $region29: #{tpu_custom_call.1} parent=1 // pred_fallthru
      _
    // Predicated region
    $region30: #{tpu_custom_call.1} parent=1 // pred_check
      _
    $region31: #{tpu_custom_call.1} parent=1 // pred_check_branch
      %41 = sbr.rel (0) target = $region33
    $region32: #{tpu_custom_call.1} parent=1 // pred_region
      _
    $region33: #{tpu_custom_call.1} parent=1 // pred_fallthru
      _
    // Predicated region
    $region34: #{tpu_custom_call.1} parent=1 // pred_check
      _
    $region35: #{tpu_custom_call.1} parent=1 // pred_check_branch
      %43 = sbr.rel (0) target = $region37
    $region36: #{tpu_custom_call.1} parent=1 // pred_region
      %44 = dma.done [#allocation4], 256
    $region37: #{tpu_custom_call.1} parent=1 // pred_fallthru
      _
    %45 = vst [vmem:[#allocation2] sm:$0xf] 0.0
    %46 = vst [vmem:[#allocation2 + $0xc] sm:$0xf] 0.0
    %v47 = vld [vmem:[%s2] sm:$0x3]
    %v48 = vld [vmem:[%s3] sm:$0x3]
    %v49 = vld [vmem:[%s4] sm:$0x3]
    %v50 = vld [vmem:[%s0] sm:$0xff]
    %v52 = vcombine.high %v50, %v50
    %vm53 = vcmask 31744
    %v55 = vsel %vm53, %v47, 0
    %vm57 = vcmask 1043456
    %v58 = vsel %vm57, %v50, 0
    %v60 = vsel %vm57, %v52, 0
    %62 = vmatprep.subr.mxu0 %v60
    %63 = vmatpush1.msra.mxu0 %v58
    %64 = vmatprep.subr.mxu0 0.0
    %65 = vmatpush1.msra.mxu0 0.0
    %66 = vmatprep.subr.mxu0 0.0
    %67 = vmatpush1.msra.mxu0 0.0
    %68 = vmatprep.subr.mxu0 0.0
    %69 = vmatpush1.msra.mxu0 0.0
    %70 = vmatprep.subr.mxu0 0.0
    %71 = vmatpush1.msra.mxu0 0.0
    %72 = vmatprep.subr.mxu0 0.0
    %73 = vmatpush1.msra.mxu0 0.0
    %74 = vmatprep.subr.mxu0 0.0
    %75 = vmatpush1.msra.mxu0 0.0
    %76 = vmatprep.subr.mxu0 0.0
    %77 = vmatpush1.msra.mxu0 0.0
    %78 = vmatprep.subr.mxu0 0.0
    %79 = vmatpush1.msra.mxu0 0.0
    %80 = vmatprep.subr.mxu0 0.0
    %81 = vmatpush1.msra.mxu0 0.0
    %82 = vmatprep.subr.mxu0 0.0
    %83 = vmatpush1.msra.mxu0 0.0
    %84 = vmatprep.subr.mxu0 0.0
    %85 = vmatpush1.msra.mxu0 0.0
    %86 = vmatprep.subr.mxu0 0.0
    %87 = vmatpush1.msra.mxu0 0.0
    %88 = vmatprep.subr.mxu0 0.0
    %89 = vmatpush1.msra.mxu0 0.0
    %90 = vmatprep.subr.mxu0 0.0
    %91 = vmatpush1.msra.mxu0 0.0
    %92 = vmatprep.subr.mxu0 0.0
    %93 = vmatpush1.msra.mxu0 0.0
    %94 = vmatprep.subr.mxu0 0.0
    %95 = vmatpush1.msra.mxu0 0.0
    %96 = vmatprep.subr.mxu0 0.0
    %97 = vmatpush1.msra.mxu0 0.0
    %98 = vmatprep.subr.mxu0 0.0
    %99 = vmatpush1.msra.mxu0 0.0
    %100 = vmatprep.subr.mxu0 0.0
    %101 = vmatpush1.msra.mxu0 0.0
    %102 = vmatprep.subr.mxu0 0.0
    %103 = vmatpush1.msra.mxu0 0.0
    %104 = vmatprep.subr.mxu0 0.0
    %105 = vmatpush1.msra.mxu0 0.0
    %106 = vmatprep.subr.mxu0 0.0
    %107 = vmatpush1.msra.mxu0 0.0
    %108 = vmatprep.subr.mxu0 0.0
    %109 = vmatpush1.msra.mxu0 0.0
    %110 = vmatprep.subr.mxu0 0.0
    %111 = vmatpush1.msra.mxu0 0.0
    %112 = vmatprep.subr.mxu0 0.0
    %113 = vmatpush1.msra.mxu0 0.0
    %114 = vmatprep.subr.mxu0 0.0
    %115 = vmatpush1.msra.mxu0 0.0
    %116 = vmatprep.subr.mxu0 0.0
    %117 = vmatpush1.msra.mxu0 0.0
    %118 = vmatprep.subr.mxu0 0.0
    %119 = vmatpush1.msra.mxu0 0.0
    %120 = vmatprep.subr.mxu0 0.0
    %121 = vmatpush1.msra.mxu0 0.0
    %122 = vmatprep.subr.mxu0 0.0
    %123 = vmatpush1.msra.mxu0 0.0
    %124 = vmatprep.subr.mxu0 0.0
    %125 = vmatpush1.msra.mxu0 0.0
    %126 = vmatprep.mubr.f32.mxu0 0.0
    %127 = vmatmul.mubr.f32.gmra.mrb[0].mxu0 %v55
    %v128 = vpop.f32.mrb[0].mxu0
    %v129 = vadd.f32 0.0, %v128
    %v130 = vpop.f32.mrb[0].mxu0
    %v131 = vadd.f32 0.0, %v130
    %132 = vdwg.mxu0
    %134 = vset.pattern.permute.xlu0 0
    %135 = vperm.xlu0 %134, %v48
    %v136 = vpop.permute.xlu0 %135
    %v138 = vmul.f32 %v129, %v136
    %v139 = vmul.f32 %v131, %v136
    %141 = vset.pattern.permute.xlu0 0
    %142 = vperm.xlu0 %141, %v49
    %v143 = vpop.permute.xlu0 %142
    %v145 = vadd.f32 %v138, %v143
    %v146 = vadd.f32 %v139, %v143
    %v147 = vsub.f32 0.0, %v145
    %v148 = vsub.f32 0.0, %v146
    %v149 = vmul.f32 %v147, 1.442695
    %v150 = vpow.pop %v149
    %v151 = vmul.f32 %v148, 1.442695
    %v152 = vpow.pop %v151
    %v153 = vadd.f32 %v150, 1.0
    %v154 = vadd.f32 %v152, 1.0
    %v155 = vrcp.pop %v153
    %v156 = vrcp.pop %v154
    %v157 = vmul.f32 %v145, %v155
    %v158 = vmul.f32 %v146, %v156
    %v161 = vcombine.low %v157, %v158
    %163 = vst [vmem:[#allocation2 + $0x4] sm:$0x33] %v161
    %s164 = scalar_lea.vmem %s0, 8
    %v165 = vld [vmem:[%s164] sm:$0xff]
    %v167 = vcombine.high %v165, %v165
    %v168 = vsel %vm57, %v165, 0
    %v170 = vsel %vm57, %v167, 0
    %172 = vmatprep.subr.mxu0 %v170
    %173 = vmatpush1.msra.mxu0 %v168
    %174 = vmatprep.subr.mxu0 0.0
    %175 = vmatpush1.msra.mxu0 0.0
    %176 = vmatprep.subr.mxu0 0.0
    %177 = vmatpush1.msra.mxu0 0.0
    %178 = vmatprep.subr.mxu0 0.0
    %179 = vmatpush1.msra.mxu0 0.0
    %180 = vmatprep.subr.mxu0 0.0
    %181 = vmatpush1.msra.mxu0 0.0
    %182 = vmatprep.subr.mxu0 0.0
    %183 = vmatpush1.msra.mxu0 0.0
    %184 = vmatprep.subr.mxu0 0.0
    %185 = vmatpush1.msra.mxu0 0.0
    %186 = vmatprep.subr.mxu0 0.0
    %187 = vmatpush1.msra.mxu0 0.0
    %188 = vmatprep.subr.mxu0 0.0
    %189 = vmatpush1.msra.mxu0 0.0
    %190 = vmatprep.subr.mxu0 0.0
    %191 = vmatpush1.msra.mxu0 0.0
    %192 = vmatprep.subr.mxu0 0.0
    %193 = vmatpush1.msra.mxu0 0.0
    %194 = vmatprep.subr.mxu0 0.0
    %195 = vmatpush1.msra.mxu0 0.0
    %196 = vmatprep.subr.mxu0 0.0
    %197 = vmatpush1.msra.mxu0 0.0
    %198 = vmatprep.subr.mxu0 0.0
    %199 = vmatpush1.msra.mxu0 0.0
    %200 = vmatprep.subr.mxu0 0.0
    %201 = vmatpush1.msra.mxu0 0.0
    %202 = vmatprep.subr.mxu0 0.0
    %203 = vmatpush1.msra.mxu0 0.0
    %204 = vmatprep.subr.mxu0 0.0
    %205 = vmatpush1.msra.mxu0 0.0
    %206 = vmatprep.subr.mxu0 0.0
    %207 = vmatpush1.msra.mxu0 0.0
    %208 = vmatprep.subr.mxu0 0.0
    %209 = vmatpush1.msra.mxu0 0.0
    %210 = vmatprep.subr.mxu0 0.0
    %211 = vmatpush1.msra.mxu0 0.0
    %212 = vmatprep.subr.mxu0 0.0
    %213 = vmatpush1.msra.mxu0 0.0
    %214 = vmatprep.subr.mxu0 0.0
    %215 = vmatpush1.msra.mxu0 0.0
    %216 = vmatprep.subr.mxu0 0.0
    %217 = vmatpush1.msra.mxu0 0.0
    %218 = vmatprep.subr.mxu0 0.0
    %219 = vmatpush1.msra.mxu0 0.0
    %220 = vmatprep.subr.mxu0 0.0
    %221 = vmatpush1.msra.mxu0 0.0
    %222 = vmatprep.subr.mxu0 0.0
    %223 = vmatpush1.msra.mxu0 0.0
    %224 = vmatprep.subr.mxu0 0.0
    %225 = vmatpush1.msra.mxu0 0.0
    %226 = vmatprep.subr.mxu0 0.0
    %227 = vmatpush1.msra.mxu0 0.0
    %228 = vmatprep.subr.mxu0 0.0
    %229 = vmatpush1.msra.mxu0 0.0
    %230 = vmatprep.subr.mxu0 0.0
    %231 = vmatpush1.msra.mxu0 0.0
    %232 = vmatprep.subr.mxu0 0.0
    %233 = vmatpush1.msra.mxu0 0.0
    %234 = vmatprep.subr.mxu0 0.0
    %235 = vmatpush1.msra.mxu0 0.0
    %236 = vmatprep.mubr.f32.mxu0 0.0
    %237 = vmatmul.mubr.f32.gmra.mrb[0].mxu0 %v55
    %v238 = vpop.f32.mrb[0].mxu0
    %v239 = vadd.f32 0.0, %v238
    %v240 = vpop.f32.mrb[0].mxu0
    %v241 = vadd.f32 0.0, %v240
    %242 = vdwg.mxu0
    %v243 = vmul.f32 %v239, %v136
    %v244 = vmul.f32 %v241, %v136
    %v245 = vadd.f32 %v243, %v143
    %v246 = vadd.f32 %v244, %v143
    %v247 = vsub.f32 0.0, %v245
    %v248 = vsub.f32 0.0, %v246
    %v249 = vmul.f32 %v247, 1.442695
    %v250 = vpow.pop %v249
    %v251 = vmul.f32 %v248, 1.442695
    %v252 = vpow.pop %v251
    %v253 = vadd.f32 %v250, 1.0
    %v254 = vadd.f32 %v252, 1.0
    %v255 = vrcp.pop %v253
    %v256 = vrcp.pop %v254
    %v257 = vmul.f32 %v245, %v255
    %v258 = vmul.f32 %v246, %v256
    %v261 = vcombine.low %v257, %v258
    %v262 = vrot.slane %v261, 6
    %264 = vst [vmem:[#allocation2 + $0x4] sm:$0xcc] %v262
    %v265 = vld [vmem:[#allocation2 + $0x4] sm:$0xff]
    %266 = vst [vmem:[#allocation6] sm:$0xff] %v265
    %v267 = vld [vmem:[#allocation3] sm:$0x1f]
    %v268 = vld [vmem:[#allocation3 + $0x8] sm:$0x1f]
    %v269 = vld [vmem:[%s5] sm:$0xf]
    %v270 = vld [vmem:[%s6] sm:$0xf]
    %v271 = vld [vmem:[%s7] sm:$0xf]
    %v272 = vld [vmem:[#allocation2] sm:$0xff]
    %v273 = vld [vmem:[#allocation2 + $0x8] sm:$0xf]
    %v274 = vld [vmem:[#allocation2 + $0x4] sm:$0xff]
    %v275 = vld [vmem:[#allocation2 + $0x4] sm:$0xff]
    %v276 = vld [vmem:[#allocation2 + $0xc] sm:$0xf]
    %v279 = vcombine.high %v272, %v272
    %280 = vrot.lane.b32.xlu0 %v272, 32
    %v281 = vpop.permute.xlu0 %280
    %282 = vrot.lane.b32.xlu0 %v279, 32
    %v283 = vpop.permute.xlu0 %282
    %284 = vrot.lane.b32.xlu0 %v273, 32
    %v285 = vpop.permute.xlu0 %284
    %vm286 = vcmask 261120
    %v287 = vsel %vm286, %v281, %v283
    %v288 = vsel %vm286, %v283, %v285
    %291 = vrot.lane.b32.xlu0 %v287, 2
    %v292 = vpop.permute.xlu0 %291
    %293 = vrot.lane.b32.xlu0 %v288, 2
    %v294 = vpop.permute.xlu0 %293
    %v295 = vlaneseq
    %v296 = vand.u32 %v295, 127
    %vm297 = vcmp.lt.s32.totalorder %v296, 2
    %v298 = vsel %vm297, %v292, %v294
    %v299 = vsel %vm297, %v294, %v292
    %301 = vset.pattern.permute.xlu0 0
    %302 = vperm.xlu0 %301, %v269
    %v303 = vpop.permute.xlu0 %302
    %v305 = vmul.f32 %v303, %v299
    %v306 = vmul.f32 %v303, %v298
    %v307 = vadd.f32 %v305, 0.0
    %v308 = vadd.f32 %v306, 0.0
    %309 = vrot.lane.b32.xlu0 %v272, 16
    %v310 = vpop.permute.xlu0 %309
    %311 = vrot.lane.b32.xlu0 %v279, 16
    %v312 = vpop.permute.xlu0 %311
    %313 = vrot.lane.b32.xlu0 %v273, 16
    %v314 = vpop.permute.xlu0 %313
    %vm315 = vcmask 130048
    %v316 = vsel %vm315, %v310, %v312
    %v317 = vsel %vm315, %v312, %v314
    %320 = vrot.lane.b32.xlu0 %v316, 2
    %v321 = vpop.permute.xlu0 %320
    %322 = vrot.lane.b32.xlu0 %v317, 2
    %v323 = vpop.permute.xlu0 %322
    %v324 = vsel %vm297, %v321, %v323
    %v325 = vsel %vm297, %v323, %v321
    %326 = vset.pattern.permute.xlu0 5
    %327 = vperm.xlu0 %326, %v269
    %v328 = vpop.permute.xlu0 %327
    %v330 = vmul.f32 %v328, %v325
    %v331 = vmul.f32 %v328, %v324
    %v332 = vadd.f32 %v307, %v330
    %v333 = vadd.f32 %v308, %v331
    %v335 = vcombine.high %v274, %v274
    %337 = vrot.lane.b32.xlu0 %v274, 2
    %v338 = vpop.permute.xlu0 %337
    %339 = vrot.lane.b32.xlu0 %v335, 2
    %v340 = vpop.permute.xlu0 %339
    %v341 = vsel %vm297, %v338, %v340
    %v342 = vsel %vm297, %v340, %v338
    %343 = vset.pattern.permute.xlu0 10
    %344 = vperm.xlu0 %343, %v269
    %v345 = vpop.permute.xlu0 %344
    %v347 = vmul.f32 %v345, %v342
    %v348 = vmul.f32 %v345, %v341
    %v349 = vadd.f32 %v332, %v347
    %v350 = vadd.f32 %v333, %v348
    %v353 = vcombine.high %v275, %v275
    %354 = vrot.lane.b32.xlu0 %v275, 112
    %v355 = vpop.permute.xlu0 %354
    %356 = vrot.lane.b32.xlu0 %v353, 112
    %v357 = vpop.permute.xlu0 %356
    %358 = vrot.lane.b32.xlu0 %v276, 112
    %v359 = vpop.permute.xlu0 %358
    %vm360 = vcmask 916480
    %v361 = vsel %vm360, %v355, %v357
    %v362 = vsel %vm360, %v357, %v359
    %365 = vrot.lane.b32.xlu0 %v361, 2
    %v366 = vpop.permute.xlu0 %365
    %367 = vrot.lane.b32.xlu0 %v362, 2
    %v368 = vpop.permute.xlu0 %367
    %v369 = vsel %vm297, %v366, %v368
    %v370 = vsel %vm297, %v368, %v366
    %371 = vset.pattern.permute.xlu0 15
    %372 = vperm.xlu0 %371, %v269
    %v373 = vpop.permute.xlu0 %372
    %v375 = vmul.f32 %v373, %v370
    %v376 = vmul.f32 %v373, %v369
    %v377 = vadd.f32 %v349, %v375
    %v378 = vadd.f32 %v350, %v376
    %379 = vrot.lane.b32.xlu0 %v275, 96
    %v380 = vpop.permute.xlu0 %379
    %381 = vrot.lane.b32.xlu0 %v353, 96
    %v382 = vpop.permute.xlu0 %381
    %383 = vrot.lane.b32.xlu0 %v276, 96
    %v384 = vpop.permute.xlu0 %383
    %vm385 = vcmask 785408
    %v386 = vsel %vm385, %v380, %v382
    %v387 = vsel %vm385, %v382, %v384
    %390 = vrot.lane.b32.xlu0 %v386, 2
    %v391 = vpop.permute.xlu0 %390
    %392 = vrot.lane.b32.xlu0 %v387, 2
    %v393 = vpop.permute.xlu0 %392
    %v394 = vsel %vm297, %v391, %v393
    %v395 = vsel %vm297, %v393, %v391
    %396 = vset.pattern.permute.xlu0 20
    %397 = vperm.xlu0 %396, %v269
    %v398 = vpop.permute.xlu0 %397
    %v400 = vmul.f32 %v398, %v395
    %v401 = vmul.f32 %v398, %v394
    %v402 = vadd.f32 %v377, %v400
    %v403 = vadd.f32 %v378, %v401
    %v404 = vlaneseq
    %v405 = vshrl.u32 %v404, 7
    %v406 = vsub.s32 0, %v405
    %v407 = vrot.slane %v267, %v406
    %v408 = vlaneseq
    %v409 = vshrl.u32 %v408, 7
    %v410 = vsub.s32 0, %v409
    %v411 = vrot.slane %v268, %v410
    %v412 = vmul.f32 %v402, %v407
    %v413 = vmul.f32 %v403, %v411
    %v414 = vadd.f32 %v412, 0.0
    %v415 = vadd.f32 %v413, 0.0
    %416 = vrot.lane.b32.xlu0 %v287, 1
    %v417 = vpop.permute.xlu0 %416
    %418 = vrot.lane.b32.xlu0 %v288, 1
    %v419 = vpop.permute.xlu0 %418
    %vm420 = vcmp.lt.s32.totalorder %v296, 1
    %v421 = vsel %vm420, %v417, %v419
    %v422 = vsel %vm420, %v419, %v417
    %423 = vset.pattern.permute.xlu0 1
    %424 = vperm.xlu0 %423, %v269
    %v425 = vpop.permute.xlu0 %424
    %v427 = vmul.f32 %v425, %v422
    %v428 = vmul.f32 %v425, %v421
    %v429 = vadd.f32 %v427, 0.0
    %v430 = vadd.f32 %v428, 0.0
    %431 = vrot.lane.b32.xlu0 %v316, 1
    %v432 = vpop.permute.xlu0 %431
    %433 = vrot.lane.b32.xlu0 %v317, 1
    %v434 = vpop.permute.xlu0 %433
    %v435 = vsel %vm420, %v432, %v434
    %v436 = vsel %vm420, %v434, %v432
    %437 = vset.pattern.permute.xlu0 6
    %438 = vperm.xlu0 %437, %v269
    %v439 = vpop.permute.xlu0 %438
    %v441 = vmul.f32 %v439, %v436
    %v442 = vmul.f32 %v439, %v435
    %v443 = vadd.f32 %v429, %v441
    %v444 = vadd.f32 %v430, %v442
    %445 = vrot.lane.b32.xlu0 %v274, 1
    %v446 = vpop.permute.xlu0 %445
    %447 = vrot.lane.b32.xlu0 %v335, 1
    %v448 = vpop.permute.xlu0 %447
    %v449 = vsel %vm420, %v446, %v448
    %v450 = vsel %vm420, %v448, %v446
    %451 = vset.pattern.permute.xlu0 11
    %452 = vperm.xlu0 %451, %v269
    %v453 = vpop.permute.xlu0 %452
    %v455 = vmul.f32 %v453, %v450
    %v456 = vmul.f32 %v453, %v449
    %v457 = vadd.f32 %v443, %v455
    %v458 = vadd.f32 %v444, %v456
    %459 = vrot.lane.b32.xlu0 %v361, 1
    %v460 = vpop.permute.xlu0 %459
    %461 = vrot.lane.b32.xlu0 %v362, 1
    %v462 = vpop.permute.xlu0 %461
    %v463 = vsel %vm420, %v460, %v462
    %v464 = vsel %vm420, %v462, %v460
    %465 = vset.pattern.permute.xlu0 16
    %466 = vperm.xlu0 %465, %v269
    %v467 = vpop.permute.xlu0 %466
    %v469 = vmul.f32 %v467, %v464
    %v470 = vmul.f32 %v467, %v463
    %v471 = vadd.f32 %v457, %v469
    %v472 = vadd.f32 %v458, %v470
    %473 = vrot.lane.b32.xlu0 %v386, 1
    %v474 = vpop.permute.xlu0 %473
    %475 = vrot.lane.b32.xlu0 %v387, 1
    %v476 = vpop.permute.xlu0 %475
    %v477 = vsel %vm420, %v474, %v476
    %v478 = vsel %vm420, %v476, %v474
    %479 = vset.pattern.permute.xlu0 21
    %480 = vperm.xlu0 %479, %v269
    %v481 = vpop.permute.xlu0 %480
    %v483 = vmul.f32 %v481, %v478
    %v484 = vmul.f32 %v481, %v477
    %v485 = vadd.f32 %v471, %v483
    %v486 = vadd.f32 %v472, %v484
    %v487 = vlaneseq
    %v488 = vshrl.u32 %v487, 7
    %v489 = vsub.s32 1, %v488
    %v490 = vrot.slane %v267, %v489
    %v491 = vlaneseq
    %v492 = vshrl.u32 %v491, 7
    %v493 = vsub.s32 1, %v492
    %v494 = vrot.slane %v268, %v493
    %v495 = vmul.f32 %v485, %v490
    %v496 = vmul.f32 %v486, %v494
    %v497 = vadd.f32 %v414, %v495
    %v498 = vadd.f32 %v415, %v496
    %499 = vset.pattern.permute.xlu0 2
    %500 = vperm.xlu0 %499, %v269
    %v501 = vpop.permute.xlu0 %500
    %v503 = vmul.f32 %v501, %v287
    %v504 = vmul.f32 %v501, %v288
    %v505 = vadd.f32 %v503, 0.0
    %v506 = vadd.f32 %v504, 0.0
    %507 = vset.pattern.permute.xlu0 7
    %508 = vperm.xlu0 %507, %v269
    %v509 = vpop.permute.xlu0 %508
    %v511 = vmul.f32 %v509, %v316
    %v512 = vmul.f32 %v509, %v317
    %v513 = vadd.f32 %v505, %v511
    %v514 = vadd.f32 %v506, %v512
    %515 = vset.pattern.permute.xlu0 12
    %516 = vperm.xlu0 %515, %v269
    %v517 = vpop.permute.xlu0 %516
    %v519 = vmul.f32 %v517, %v274
    %v520 = vmul.f32 %v517, %v335
    %v521 = vadd.f32 %v513, %v519
    %v522 = vadd.f32 %v514, %v520
    %523 = vset.pattern.permute.xlu0 17
    %524 = vperm.xlu0 %523, %v269
    %v525 = vpop.permute.xlu0 %524
    %v527 = vmul.f32 %v525, %v361
    %v528 = vmul.f32 %v525, %v362
    %v529 = vadd.f32 %v521, %v527
    %v530 = vadd.f32 %v522, %v528
    %531 = vset.pattern.permute.xlu0 22
    %532 = vperm.xlu0 %531, %v269
    %v533 = vpop.permute.xlu0 %532
    %v535 = vmul.f32 %v533, %v386
    %v536 = vmul.f32 %v533, %v387
    %v537 = vadd.f32 %v529, %v535
    %v538 = vadd.f32 %v530, %v536
    %v539 = vlaneseq
    %v540 = vshrl.u32 %v539, 7
    %v541 = vsub.s32 2, %v540
    %v542 = vrot.slane %v267, %v541
    %v543 = vlaneseq
    %v544 = vshrl.u32 %v543, 7
    %v545 = vsub.s32 2, %v544
    %v546 = vrot.slane %v268, %v545
    %v547 = vmul.f32 %v537, %v542
    %v548 = vmul.f32 %v538, %v546
    %v549 = vadd.f32 %v497, %v547
    %v550 = vadd.f32 %v498, %v548
    %551 = vrot.lane.b32.xlu0 %v287, 127
    %v552 = vpop.permute.xlu0 %551
    %553 = vrot.lane.b32.xlu0 %v288, 127
    %v554 = vpop.permute.xlu0 %553
    %vm555 = vcmp.lt.s32.totalorder %v296, 127
    %v556 = vsel %vm555, %v552, %v554
    %v557 = vsel %vm555, %v554, %v552
    %558 = vset.pattern.permute.xlu0 3
    %559 = vperm.xlu0 %558, %v269
    %v560 = vpop.permute.xlu0 %559
    %v562 = vmul.f32 %v560, %v556
    %v563 = vmul.f32 %v560, %v557
    %v564 = vadd.f32 %v562, 0.0
    %v565 = vadd.f32 %v563, 0.0
    %566 = vrot.lane.b32.xlu0 %v316, 127
    %v567 = vpop.permute.xlu0 %566
    %568 = vrot.lane.b32.xlu0 %v317, 127
    %v569 = vpop.permute.xlu0 %568
    %v570 = vsel %vm555, %v567, %v569
    %v571 = vsel %vm555, %v569, %v567
    %572 = vset.pattern.permute.xlu0 8
    %573 = vperm.xlu0 %572, %v269
    %v574 = vpop.permute.xlu0 %573
    %v576 = vmul.f32 %v574, %v570
    %v577 = vmul.f32 %v574, %v571
    %v578 = vadd.f32 %v564, %v576
    %v579 = vadd.f32 %v565, %v577
    %580 = vrot.lane.b32.xlu0 %v274, 127
    %v581 = vpop.permute.xlu0 %580
    %582 = vrot.lane.b32.xlu0 %v335, 127
    %v583 = vpop.permute.xlu0 %582
    %v584 = vsel %vm555, %v581, %v583
    %v585 = vsel %vm555, %v583, %v581
    %586 = vset.pattern.permute.xlu0 13
    %587 = vperm.xlu0 %586, %v269
    %v588 = vpop.permute.xlu0 %587
    %v590 = vmul.f32 %v588, %v584
    %v591 = vmul.f32 %v588, %v585
    %v592 = vadd.f32 %v578, %v590
    %v593 = vadd.f32 %v579, %v591
    %594 = vrot.lane.b32.xlu0 %v361, 127
    %v595 = vpop.permute.xlu0 %594
    %596 = vrot.lane.b32.xlu0 %v362, 127
    %v597 = vpop.permute.xlu0 %596
    %v598 = vsel %vm555, %v595, %v597
    %v599 = vsel %vm555, %v597, %v595
    %600 = vset.pattern.permute.xlu0 18
    %601 = vperm.xlu0 %600, %v269
    %v602 = vpop.permute.xlu0 %601
    %v604 = vmul.f32 %v602, %v598
    %v605 = vmul.f32 %v602, %v599
    %v606 = vadd.f32 %v592, %v604
    %v607 = vadd.f32 %v593, %v605
    %608 = vrot.lane.b32.xlu0 %v386, 127
    %v609 = vpop.permute.xlu0 %608
    %610 = vrot.lane.b32.xlu0 %v387, 127
    %v611 = vpop.permute.xlu0 %610
    %v612 = vsel %vm555, %v609, %v611
    %v613 = vsel %vm555, %v611, %v609
    %614 = vset.pattern.permute.xlu0 23
    %615 = vperm.xlu0 %614, %v269
    %v616 = vpop.permute.xlu0 %615
    %v618 = vmul.f32 %v616, %v612
    %v619 = vmul.f32 %v616, %v613
    %v620 = vadd.f32 %v606, %v618
    %v621 = vadd.f32 %v607, %v619
    %v622 = vlaneseq
    %v623 = vshrl.u32 %v622, 7
    %v624 = vsub.s32 3, %v623
    %v625 = vrot.slane %v267, %v624
    %v626 = vlaneseq
    %v627 = vshrl.u32 %v626, 7
    %v628 = vsub.s32 3, %v627
    %v629 = vrot.slane %v268, %v628
    %v630 = vmul.f32 %v620, %v625
    %v631 = vmul.f32 %v621, %v629
    %v632 = vadd.f32 %v549, %v630
    %v633 = vadd.f32 %v550, %v631
    %634 = vrot.lane.b32.xlu0 %v287, 126
    %v635 = vpop.permute.xlu0 %634
    %636 = vrot.lane.b32.xlu0 %v288, 126
    %v637 = vpop.permute.xlu0 %636
    %vm638 = vcmp.lt.s32.totalorder %v296, 126
    %v639 = vsel %vm638, %v635, %v637
    %v640 = vsel %vm638, %v637, %v635
    %641 = vset.pattern.permute.xlu0 4
    %642 = vperm.xlu0 %641, %v269
    %v643 = vpop.permute.xlu0 %642
    %v645 = vmul.f32 %v643, %v639
    %v646 = vmul.f32 %v643, %v640
    %v647 = vadd.f32 %v645, 0.0
    %v648 = vadd.f32 %v646, 0.0
    %649 = vrot.lane.b32.xlu0 %v316, 126
    %v650 = vpop.permute.xlu0 %649
    %651 = vrot.lane.b32.xlu0 %v317, 126
    %v652 = vpop.permute.xlu0 %651
    %v653 = vsel %vm638, %v650, %v652
    %v654 = vsel %vm638, %v652, %v650
    %655 = vset.pattern.permute.xlu0 9
    %656 = vperm.xlu0 %655, %v269
    %v657 = vpop.permute.xlu0 %656
    %v659 = vmul.f32 %v657, %v653
    %v660 = vmul.f32 %v657, %v654
    %v661 = vadd.f32 %v647, %v659
    %v662 = vadd.f32 %v648, %v660
    %663 = vrot.lane.b32.xlu0 %v274, 126
    %v664 = vpop.permute.xlu0 %663
    %665 = vrot.lane.b32.xlu0 %v335, 126
    %v666 = vpop.permute.xlu0 %665
    %v667 = vsel %vm638, %v664, %v666
    %v668 = vsel %vm638, %v666, %v664
    %669 = vset.pattern.permute.xlu0 14
    %670 = vperm.xlu0 %669, %v269
    %v671 = vpop.permute.xlu0 %670
    %v673 = vmul.f32 %v671, %v667
    %v674 = vmul.f32 %v671, %v668
    %v675 = vadd.f32 %v661, %v673
    %v676 = vadd.f32 %v662, %v674
    %677 = vrot.lane.b32.xlu0 %v361, 126
    %v678 = vpop.permute.xlu0 %677
    %679 = vrot.lane.b32.xlu0 %v362, 126
    %v680 = vpop.permute.xlu0 %679
    %v681 = vsel %vm638, %v678, %v680
    %v682 = vsel %vm638, %v680, %v678
    %683 = vset.pattern.permute.xlu0 19
    %684 = vperm.xlu0 %683, %v269
    %v685 = vpop.permute.xlu0 %684
    %v687 = vmul.f32 %v685, %v681
    %v688 = vmul.f32 %v685, %v682
    %v689 = vadd.f32 %v675, %v687
    %v690 = vadd.f32 %v676, %v688
    %691 = vrot.lane.b32.xlu0 %v386, 126
    %v692 = vpop.permute.xlu0 %691
    %693 = vrot.lane.b32.xlu0 %v387, 126
    %v694 = vpop.permute.xlu0 %693
    %v695 = vsel %vm638, %v692, %v694
    %v696 = vsel %vm638, %v694, %v692
    %697 = vset.pattern.permute.xlu0 24
    %698 = vperm.xlu0 %697, %v269
    %v699 = vpop.permute.xlu0 %698
    %v701 = vmul.f32 %v699, %v695
    %v702 = vmul.f32 %v699, %v696
    %v703 = vadd.f32 %v689, %v701
    %v704 = vadd.f32 %v690, %v702
    %v705 = vlaneseq
    %v706 = vshrl.u32 %v705, 7
    %v707 = vsub.s32 4, %v706
    %v708 = vrot.slane %v267, %v707
    %v709 = vlaneseq
    %v710 = vshrl.u32 %v709, 7
    %v711 = vsub.s32 4, %v710
    %v712 = vrot.slane %v268, %v711
    %v713 = vmul.f32 %v703, %v708
    %v714 = vmul.f32 %v704, %v712
    %v715 = vadd.f32 %v632, %v713
    %v716 = vadd.f32 %v633, %v714
    %718 = vset.pattern.permute.xlu0 0
    %719 = vperm.xlu0 %718, %v270
    %v720 = vpop.permute.xlu0 %719
    %v722 = vmul.f32 %v715, %v720
    %v723 = vmul.f32 %v716, %v720
    %725 = vset.pattern.permute.xlu0 0
    %726 = vperm.xlu0 %725, %v271
    %v727 = vpop.permute.xlu0 %726
    %v729 = vadd.f32 %v722, %v727
    %v730 = vadd.f32 %v723, %v727
    %v731 = vsub.f32 0.0, %v729
    %v732 = vsub.f32 0.0, %v730
    %v733 = vmul.f32 %v731, 1.442695
    %v734 = vpow.pop %v733
    %v735 = vmul.f32 %v732, 1.442695
    %v736 = vpow.pop %v735
    %v737 = vadd.f32 %v734, 1.0
    %v738 = vadd.f32 %v736, 1.0
    %v739 = vrcp.pop %v737
    %v740 = vrcp.pop %v738
    %v741 = vmul.f32 %v729, %v739
    %v742 = vmul.f32 %v730, %v740
    %v745 = vcombine.low %v741, %v742
    %747 = vst [vmem:[#allocation7] sm:$0xff] %v745
    // Predicated region
    $region38: #{tpu_custom_call.1} parent=1 // pred_check
      _
    $region39: #{tpu_custom_call.1} parent=1 // pred_check_branch
      %749 = sbr.rel (0) target = $region41
    $region40: #{tpu_custom_call.1} parent=1 // pred_region
      %s751 = ssub.s32 128, 128
      %752 = vsyncadd [#allocation5], %s751
      %s754 = sshll.u32 [#allocation6], 4
      %s755 = int_to_ptr.vmem [resolvable:$true] %s754
      %757 = dma.vmem_to_hbm [thread:$0]  %s755, 128, %s8, [#allocation5]
    $region41: #{tpu_custom_call.1} parent=1 // pred_fallthru
      _
    // Predicated region
    $region42: #{tpu_custom_call.1} parent=1 // pred_check
      _
    $region43: #{tpu_custom_call.1} parent=1 // pred_check_branch
      %759 = sbr.rel (0) target = $region45
    $region44: #{tpu_custom_call.1} parent=1 // pred_region
      %s761 = ssub.s32 128, 128
      %762 = vsyncadd [#allocation8], %s761
      %s764 = sshll.u32 [#allocation7], 4
      %s765 = int_to_ptr.vmem [resolvable:$true] %s764
      %767 = dma.vmem_to_hbm [thread:$0]  %s765, 128, %s9, [#allocation8]
    $region45: #{tpu_custom_call.1} parent=1 // pred_fallthru
      _
    // Predicated region
    $region46: #{tpu_custom_call.1} parent=1 // pred_check
      _
    $region47: #{tpu_custom_call.1} parent=1 // pred_check_branch
      %769 = sbr.rel (0) target = $region49
    $region48: #{tpu_custom_call.1} parent=1 // pred_region
      %770 = dma.done [#allocation5], 128
    $region49: #{tpu_custom_call.1} parent=1 // pred_fallthru
      _
    // Predicated region
    $region50: #{tpu_custom_call.1} parent=1 // pred_check
      _
    $region51: #{tpu_custom_call.1} parent=1 // pred_check_branch
      %772 = sbr.rel (0) target = $region53
    $region52: #{tpu_custom_call.1} parent=1 // pred_region
      %773 = dma.done [#allocation8], 128
    $region53: #{tpu_custom_call.1} parent=1 // pred_fallthru
      _
    %774 = vsyncpa [#allocation4], 1
    %775 = vsyncpa [#allocation5], 1
    %776 = vsyncpa [#allocation8], 1

</llo_original>
